<compile_context>
chip_gen: v7x
topology: tpu7x:2x2x1
jax: 0.10.0
libtpu: 0.0.40
codegen_flags: <defaults>
</compile_context>

<pallas_src>
import inspect

import jax
import jax.numpy as jnp
from jax.experimental import pallas as pl
from jax.experimental.pallas import tpu as pltpu

EPS = 1e-5  # nn.LayerNorm default

try:
    _SINGLE_BUFFER_SUPPORTED = (
        hasattr(pl, "Buffered")
        and "pipeline_mode" in inspect.signature(pl.BlockSpec).parameters
    )
except (TypeError, ValueError):  # pragma: no cover
    _SINGLE_BUFFER_SUPPORTED = False


def prenorm_kernel(x_ref, g_ref, b_ref, w_ref, wb_ref, o_ref):
    # x_ref:  (tm, D)       row tile of tokens
    # g_ref:  (1, D)        LayerNorm weight (gamma)
    # b_ref:  (1, D)        LayerNorm bias   (beta)
    # w_ref:  (D, tn|H_p)   fn (Linear) weight (full, resident) or column tile
    # wb_ref: (1, tn|H_p)   fn (Linear) bias
    # o_ref:  (tm, tn|H_p)  output tile
    x = x_ref[...].astype(jnp.float32)

    # One-pass LayerNorm statistics in f32 (biased variance, like torch):
    # var = E[x^2] - mean^2, clamped at 0 so rsqrt never sees a tiny negative.
    mean = jnp.mean(x, axis=-1, keepdims=True)
    mean_sq = jnp.mean(x * x, axis=-1, keepdims=True)
    var = jnp.maximum(mean_sq - mean * mean, 0.0)
    xn = (x - mean) * jax.lax.rsqrt(var + EPS)
    y = xn * g_ref[...].astype(jnp.float32) + b_ref[...].astype(jnp.float32)

    # fn: Linear(dim -> hidden) on the MXU, matmul in the weight dtype (bf16)
    # with f32 accumulation.
    out = jnp.dot(y.astype(w_ref.dtype), w_ref[...],
                  preferred_element_type=jnp.float32)
    out = out + wb_ref[...].astype(jnp.float32)
    o_ref[...] = out.astype(o_ref.dtype)


def _round_up(a, m):
    return pl.cdiv(a, m) * m


def prenorm(x, gamma, beta, w, wb, *, tm=512, tn=512):
    """x: (B, N, D) -> (B, N, H) where H = w.shape[1]."""
    B, N, D = x.shape
    H = w.shape[1]
    rows = B * N

    x_it = jnp.dtype(x.dtype).itemsize
    w_it = jnp.dtype(w.dtype).itemsize
    o_it = x_it  # output dtype == activation dtype

    # Sublane packing multiple for the activation/output dtype
    # (f32 -> 8, bf16 -> 16, int8/fp8 -> 32).
    sub = {1: 32, 2: 16, 4: 8}.get(x_it, 8)

    # Lane-pad H once to a multiple of 128 for dense stores (weights are
    # small; this padding is a one-time cost, not per grid step).
    H_p = _round_up(H, 128)

    # Generation-aware VMEM budget (leave headroom for compiler scratch).
    try:
        vmem_cap = int(pltpu.get_tpu_info().vmem_capacity_bytes)
    except Exception:  # conservative: assume v7x (64 MiB per TensorCore)
        vmem_cap = 64 * 1024 * 1024
    vmem_budget = int(0.8 * vmem_cap)

    rows_ceil = _round_up(rows, sub)
    tm_req = min(_round_up(max(tm, sub), sub), rows_ceil)

    const_factor = 1 if _SINGLE_BUFFER_SUPPORTED else 2

    def resident_bytes(tm_try):
        return (const_factor * D * H_p * w_it           # resident weight
                + 2 * tm_try * D * x_it                 # x tile (double buffered)
                + 2 * tm_try * H_p * o_it               # out tile (double buffered)
                + tm_try * (D + H_p) * 4                # f32 intermediates
                + const_factor * (2 * D + H_p) * 4)     # gamma / beta / bias

    def streaming_bytes(tm_try, tn_try):
        return (2 * tm_try * D * x_it
                + 2 * D * tn_try * w_it
                + 2 * tm_try * tn_try * o_it
                + tm_try * (D + tn_try) * 4
                + 2 * (2 * D + tn_try) * 4)

    # Prefer the resident-weight layout; shrink tm if needed to fit.
    tm_r = tm_req
    while tm_r > sub and resident_bytes(tm_r) > vmem_budget:
        tm_r = max(sub, _round_up(tm_r // 2, sub))
    resident = resident_bytes(tm_r) <= vmem_budget

    # Streaming-fallback tiles (only used when the weight cannot stay resident).
    tn_eff = min(_round_up(max(tn, 128), 128), H_p)
    tm_s = tm_req
    while streaming_bytes(tm_s, tn_eff) > vmem_budget and tn_eff > 128:
        tn_eff = max(128, _round_up(tn_eff // 2, 128))
    while streaming_bytes(tm_s, tn_eff) > vmem_budget and tm_s > sub:
        tm_s = max(sub, _round_up(tm_s // 2, sub))

    # Flatten tokens to rows.  No row padding: the grid uses pl.cdiv and relies
    # on Pallas partial-block masking for the ragged last row tile.
    x2 = x.reshape(rows, D)
    gamma2 = gamma.reshape(1, D)
    beta2 = beta.reshape(1, D)
    w2 = w
    wb2 = wb.reshape(1, H)
    if H_p != H:
        w2 = jnp.pad(w2, ((0, 0), (0, H_p - H)))
        wb2 = jnp.pad(wb2, ((0, 0), (0, H_p - H)))

    def build_call(single_buffer_consts):
        def const_spec(shape, index_map):
            if single_buffer_consts:
                return pl.BlockSpec(shape, index_map,
                                    pipeline_mode=pl.Buffered(1))
            return pl.BlockSpec(shape, index_map)

        if resident:
            # 1-D grid over row tiles; the full (D, H_p) weight stays in VMEM.
            grid = (pl.cdiv(rows, tm_r),)
            in_specs = [
                pl.BlockSpec((tm_r, D), lambda i: (i, 0)),     # x row tile
                const_spec((1, D), lambda i: (0, 0)),          # gamma
                const_spec((1, D), lambda i: (0, 0)),          # beta
                const_spec((D, H_p), lambda i: (0, 0)),        # resident weight
                const_spec((1, H_p), lambda i: (0, 0)),        # bias
            ]
            out_spec = pl.BlockSpec((tm_r, H_p), lambda i: (i, 0))
            dim_sem = ("parallel",)
            footprint = resident_bytes(tm_r)
        else:
            # Column axis OUTER, rows INNER: weight column tile is resident
            # across the inner row sweep, x streams.
            grid = (pl.cdiv(H_p, tn_eff), pl.cdiv(rows, tm_s))
            in_specs = [
                pl.BlockSpec((tm_s, D), lambda j, i: (i, 0)),      # x row tile
                const_spec((1, D), lambda j, i: (0, 0)),           # gamma
                const_spec((1, D), lambda j, i: (0, 0)),           # beta
                pl.BlockSpec((D, tn_eff), lambda j, i: (0, j)),    # weight cols
                pl.BlockSpec((1, tn_eff), lambda j, i: (0, j)),    # bias cols
            ]
            out_spec = pl.BlockSpec((tm_s, tn_eff), lambda j, i: (i, j))
            dim_sem = ("parallel", "parallel")
            footprint = streaming_bytes(tm_s, tn_eff)

        vmem_limit = int(min(vmem_budget,
                             max(2 * footprint, 32 * 1024 * 1024)))

        return pl.pallas_call(
            prenorm_kernel,
            out_shape=jax.ShapeDtypeStruct((rows, H_p), x.dtype),
            grid_spec=pltpu.PrefetchScalarGridSpec(
                num_scalar_prefetch=0,
                grid=grid,
                in_specs=in_specs,
                out_specs=out_spec,
            ),
            compiler_params=pltpu.CompilerParams(
                dimension_semantics=dim_sem,
                vmem_limit_bytes=vmem_limit,
            ),
        )

    args = (x2, gamma2, beta2, w2, wb2)
    if _SINGLE_BUFFER_SUPPORTED:
        try:
            out2 = build_call(True)(*args)
        except Exception:
            # Single-buffered grid-constant operands unsupported in this jax
            # version -> fall back to default double buffering.
            out2 = build_call(False)(*args)
    else:
        out2 = build_call(False)(*args)

    if H_p != H:
        out2 = out2[:, :H]
    return out2.reshape(B, N, H)


def prenorm_ref(x, gamma, beta, w, wb):
    # Pure-JAX reference mirroring the kernel's compute path:
    # LayerNorm in f32, cast to weight dtype, matmul with f32 accumulation.
    xf = x.astype(jnp.float32)
    mean = jnp.mean(xf, axis=-1, keepdims=True)
    var = jnp.mean((xf - mean) ** 2, axis=-1, keepdims=True)
    xn = (xf - mean) / jnp.sqrt(var + EPS)
    y = xn * gamma.astype(jnp.float32) + beta.astype(jnp.float32)
    out = jnp.dot(y.astype(w.dtype).astype(jnp.float32),
                  w.astype(jnp.float32)) + wb.astype(jnp.float32)
    return out.astype(x.dtype)


if __name__ == "__main__":
    key = jax.random.PRNGKey(0)
    # Small but lane-friendly demo shapes (D, H multiples of 128, like real
    # ViT dims): batch=2, seq=8, dim=128, fn hidden=256.
    B, N, D, H = 2, 8, 128, 256

    kx, kg, kb, kw, kwb = jax.random.split(key, 5)
    # Activations / weights in bf16 (MXU-native); LN params and Linear bias
    # kept in f32.
    x = jax.random.normal(kx, (B, N, D), dtype=jnp.float32).astype(jnp.bfloat16)

    # LayerNorm params (PyTorch init: weight=1, bias=0; perturbed
    # deterministically so the affine path is actually exercised).
    gamma = jnp.ones((D,), jnp.float32) + 0.1 * jax.random.normal(kg, (D,))
    beta = 0.1 * jax.random.normal(kb, (D,), dtype=jnp.float32)

    # fn = Linear(D, H) params.  TODO(synk): `fn` is an injected submodule in
    # the original PreNorm; a Linear is used here as a concrete stand-in.
    w = (jax.random.normal(kw, (D, H), dtype=jnp.float32)
         / jnp.sqrt(D)).astype(jnp.bfloat16)
    wb = 0.1 * jax.random.normal(kwb, (H,), dtype=jnp.float32)

    out = prenorm(x, gamma, beta, w, wb)
    jax.block_until_ready(out)

    ref = prenorm_ref(x, gamma, beta, w, wb)
    assert out.shape == (B, N, H)
    assert jnp.allclose(out.astype(jnp.float32), ref.astype(jnp.float32),
                        atol=2e-2, rtol=2e-2), "mismatch vs reference"

    print("KERNEL_OK")
</pallas_src>

<mosaic_0001>
module attributes {stable_mosaic.version = 11 : i64} {
  func.func @prenorm_kernel(%arg0: i32, %arg1: memref<16x128xbf16, #tpu.memory_space<vmem>>, %arg2: memref<1x128xf32, #tpu.memory_space<vmem>>, %arg3: memref<1x128xf32, #tpu.memory_space<vmem>>, %arg4: memref<128x256xbf16, #tpu.memory_space<vmem>>, %arg5: memref<1x256xf32, #tpu.memory_space<vmem>>, %arg6: memref<16x256xbf16, #tpu.memory_space<vmem>>) attributes {dimension_semantics = [#tpu.dimension_semantics<parallel>], iteration_bounds = array<i64: 1>, scalar_prefetch = 0 : i64, scratch_operands = 0 : i64, tpu.core_type = #tpu.core_type<tc>, window_params = [{transform_indices = @transform_0, window_bounds = array<i64: 16, 128>}, {pipeline_mode = #tpu.pipeline_mode<synchronous>, transform_indices = @transform_1, window_bounds = array<i64: 1, 128>}, {pipeline_mode = #tpu.pipeline_mode<synchronous>, transform_indices = @transform_2, window_bounds = array<i64: 1, 128>}, {pipeline_mode = #tpu.pipeline_mode<synchronous>, transform_indices = @transform_3, window_bounds = array<i64: 128, 256>}, {pipeline_mode = #tpu.pipeline_mode<synchronous>, transform_indices = @transform_4, window_bounds = array<i64: 1, 256>}, {transform_indices = @transform_5, window_bounds = array<i64: 16, 256>}]} {
    %c0 = arith.constant 0 : index
    %c0_0 = arith.constant 0 : index
    %0 = vector.load %arg1[%c0, %c0_0] : memref<16x128xbf16, #tpu.memory_space<vmem>>, vector<16x128xbf16>
    %1 = arith.extf %0 : vector<16x128xbf16> to vector<16x128xf32>
    %cst = arith.constant dense<0.000000e+00> : vector<16xf32>
    %2 = vector.multi_reduction <add>, %1, %cst [1] : vector<16x128xf32> to vector<16xf32>
    %3 = vector.shape_cast %2 : vector<16xf32> to vector<16x1xf32>
    %cst_1 = arith.constant 1.280000e+02 : f32
    %4 = vector.broadcast %cst_1 : f32 to vector<16x1xf32>
    %5 = arith.divf %3, %4 : vector<16x1xf32>
    %6 = arith.mulf %1, %1 : vector<16x128xf32>
    %cst_2 = arith.constant dense<0.000000e+00> : vector<16xf32>
    %7 = vector.multi_reduction <add>, %6, %cst_2 [1] : vector<16x128xf32> to vector<16xf32>
    %8 = vector.shape_cast %7 : vector<16xf32> to vector<16x1xf32>
    %cst_3 = arith.constant 1.280000e+02 : f32
    %9 = vector.broadcast %cst_3 : f32 to vector<16x1xf32>
    %10 = arith.divf %8, %9 : vector<16x1xf32>
    %11 = arith.mulf %5, %5 : vector<16x1xf32>
    %12 = arith.subf %10, %11 : vector<16x1xf32>
    %cst_4 = arith.constant 0.000000e+00 : f32
    %13 = vector.broadcast %cst_4 : f32 to vector<16x1xf32>
    %14 = arith.maximumf %12, %13 : vector<16x1xf32>
    %15 = vector.broadcast %5 : vector<16x1xf32> to vector<16x128xf32>
    %16 = arith.subf %1, %15 : vector<16x128xf32>
    %cst_5 = arith.constant 9.99999974E-6 : f32
    %17 = vector.broadcast %cst_5 : f32 to vector<16x1xf32>
    %18 = arith.addf %14, %17 : vector<16x1xf32>
    %19 = math.rsqrt %18 : vector<16x1xf32>
    %20 = vector.broadcast %19 : vector<16x1xf32> to vector<16x128xf32>
    %21 = arith.mulf %16, %20 : vector<16x128xf32>
    %c0_6 = arith.constant 0 : index
    %c0_7 = arith.constant 0 : index
    %22 = vector.load %arg2[%c0_6, %c0_7] : memref<1x128xf32, #tpu.memory_space<vmem>>, vector<1x128xf32>
    %23 = vector.broadcast %22 : vector<1x128xf32> to vector<16x128xf32>
    %24 = arith.mulf %21, %23 : vector<16x128xf32>
    %c0_8 = arith.constant 0 : index
    %c0_9 = arith.constant 0 : index
    %25 = vector.load %arg3[%c0_8, %c0_9] : memref<1x128xf32, #tpu.memory_space<vmem>>, vector<1x128xf32>
    %26 = vector.broadcast %25 : vector<1x128xf32> to vector<16x128xf32>
    %27 = arith.addf %24, %26 : vector<16x128xf32>
    %28 = arith.truncf %27 : vector<16x128xf32> to vector<16x128xbf16>
    %c0_10 = arith.constant 0 : index
    %c0_11 = arith.constant 0 : index
    %29 = vector.load %arg4[%c0_10, %c0_11] : memref<128x256xbf16, #tpu.memory_space<vmem>>, vector<128x256xbf16>
    %cst_12 = arith.constant dense<0.000000e+00> : vector<16x256xf32>
    %30 = tpu.matmul %28, %29, %cst_12 {dimension_numbers = #tpu.dot_dimension_numbers<[1], [0], [0], [1], [0, 0, 1, 1], [], []>} : vector<16x128xbf16>, vector<128x256xbf16>, vector<16x256xf32> -> vector<16x256xf32>
    %c0_13 = arith.constant 0 : index
    %c0_14 = arith.constant 0 : index
    %31 = vector.load %arg5[%c0_13, %c0_14] : memref<1x256xf32, #tpu.memory_space<vmem>>, vector<1x256xf32>
    %32 = vector.broadcast %31 : vector<1x256xf32> to vector<16x256xf32>
    %33 = arith.addf %30, %32 : vector<16x256xf32>
    %34 = arith.truncf %33 : vector<16x256xf32> to vector<16x256xbf16>
    %c0_15 = arith.constant 0 : index
    %c0_16 = arith.constant 0 : index
    %35 = vector.load %arg6[%c0_15, %c0_16] : memref<16x256xbf16, #tpu.memory_space<vmem>>, vector<16x256xbf16>
    tpu.vector_store %arg6[%c0_15, %c0_16], %34 {strides = array<i32>} : memref<16x256xbf16, #tpu.memory_space<vmem>>, vector<16x256xbf16>,
    return
  }
  func.func @transform_0(%arg0: i32) -> (i32, i32) {
    %c0_i32 = arith.constant 0 : i32
    %c0_i32_0 = arith.constant 0 : i32
    return %arg0, %c0_i32 : i32, i32
  }
  func.func @transform_1(%arg0: i32) -> (i32, i32) {
    %c0_i32 = arith.constant 0 : i32
    %c0_i32_0 = arith.constant 0 : i32
    %c0_i32_1 = arith.constant 0 : i32
    return %c0_i32, %c0_i32_0 : i32, i32
  }
  func.func @transform_2(%arg0: i32) -> (i32, i32) {
    %c0_i32 = arith.constant 0 : i32
    %c0_i32_0 = arith.constant 0 : i32
    %c0_i32_1 = arith.constant 0 : i32
    return %c0_i32, %c0_i32_0 : i32, i32
  }
  func.func @transform_3(%arg0: i32) -> (i32, i32) {
    %c0_i32 = arith.constant 0 : i32
    %c0_i32_0 = arith.constant 0 : i32
    %c0_i32_1 = arith.constant 0 : i32
    return %c0_i32, %c0_i32_0 : i32, i32
  }
  func.func @transform_4(%arg0: i32) -> (i32, i32) {
    %c0_i32 = arith.constant 0 : i32
    %c0_i32_0 = arith.constant 0 : i32
    %c0_i32_1 = arith.constant 0 : i32
    return %c0_i32, %c0_i32_0 : i32, i32
  }
  func.func @transform_5(%arg0: i32) -> (i32, i32) {
    %c0_i32 = arith.constant 0 : i32
    %c0_i32_0 = arith.constant 0 : i32
    return %arg0, %c0_i32 : i32, i32
  }
}

module attributes {stable_mosaic.version = 11 : i64} {
  func.func @prenorm_kernel(%arg0: i32, %arg1: memref<16x128xbf16, #tpu.memory_space<vmem>>, %arg2: memref<1x128xf32, #tpu.memory_space<vmem>>, %arg3: memref<1x128xf32, #tpu.memory_space<vmem>>, %arg4: memref<128x256xbf16, #tpu.memory_space<vmem>>, %arg5: memref<1x256xf32, #tpu.memory_space<vmem>>, %arg6: memref<16x256xbf16, #tpu.memory_space<vmem>>) attributes {dimension_semantics = [#tpu.dimension_semantics<parallel>], iteration_bounds = array<i64: 1>, scalar_prefetch = 0 : i64, scratch_operands = 0 : i64, tpu.core_type = #tpu.core_type<tc>, window_params = [{transform_indices = @transform_0, window_bounds = array<i64: 16, 128>}, {pipeline_mode = #tpu.pipeline_mode<synchronous>, transform_indices = @transform_1, window_bounds = array<i64: 1, 128>}, {pipeline_mode = #tpu.pipeline_mode<synchronous>, transform_indices = @transform_2, window_bounds = array<i64: 1, 128>}, {pipeline_mode = #tpu.pipeline_mode<synchronous>, transform_indices = @transform_3, window_bounds = array<i64: 128, 256>}, {pipeline_mode = #tpu.pipeline_mode<synchronous>, transform_indices = @transform_4, window_bounds = array<i64: 1, 256>}, {transform_indices = @transform_5, window_bounds = array<i64: 16, 256>}]} {
    %c0 = arith.constant 0 : index
    %c0_0 = arith.constant 0 : index
    %0 = vector.load %arg1[%c0, %c0_0] : memref<16x128xbf16, #tpu.memory_space<vmem>>, vector<16x128xbf16>
    %1 = arith.extf %0 : vector<16x128xbf16> to vector<16x128xf32>
    %cst = arith.constant dense<0.000000e+00> : vector<16xf32>
    %2 = vector.multi_reduction <add>, %1, %cst [1] : vector<16x128xf32> to vector<16xf32>
    %3 = vector.shape_cast %2 : vector<16xf32> to vector<16x1xf32>
    %cst_1 = arith.constant 1.280000e+02 : f32
    %4 = vector.broadcast %cst_1 : f32 to vector<16x1xf32>
    %5 = arith.divf %3, %4 : vector<16x1xf32>
    %6 = arith.mulf %1, %1 : vector<16x128xf32>
    %cst_2 = arith.constant dense<0.000000e+00> : vector<16xf32>
    %7 = vector.multi_reduction <add>, %6, %cst_2 [1] : vector<16x128xf32> to vector<16xf32>
    %8 = vector.shape_cast %7 : vector<16xf32> to vector<16x1xf32>
    %cst_3 = arith.constant 1.280000e+02 : f32
    %9 = vector.broadcast %cst_3 : f32 to vector<16x1xf32>
    %10 = arith.divf %8, %9 : vector<16x1xf32>
    %11 = arith.mulf %5, %5 : vector<16x1xf32>
    %12 = arith.subf %10, %11 : vector<16x1xf32>
    %cst_4 = arith.constant 0.000000e+00 : f32
    %13 = vector.broadcast %cst_4 : f32 to vector<16x1xf32>
    %14 = arith.maximumf %12, %13 : vector<16x1xf32>
    %15 = vector.broadcast %5 : vector<16x1xf32> to vector<16x128xf32>
    %16 = arith.subf %1, %15 : vector<16x128xf32>
    %cst_5 = arith.constant 9.99999974E-6 : f32
    %17 = vector.broadcast %cst_5 : f32 to vector<16x1xf32>
    %18 = arith.addf %14, %17 : vector<16x1xf32>
    %19 = math.rsqrt %18 : vector<16x1xf32>
    %20 = vector.broadcast %19 : vector<16x1xf32> to vector<16x128xf32>
    %21 = arith.mulf %16, %20 : vector<16x128xf32>
    %c0_6 = arith.constant 0 : index
    %c0_7 = arith.constant 0 : index
    %22 = vector.load %arg2[%c0_6, %c0_7] : memref<1x128xf32, #tpu.memory_space<vmem>>, vector<1x128xf32>
    %23 = vector.broadcast %22 : vector<1x128xf32> to vector<16x128xf32>
    %24 = arith.mulf %21, %23 : vector<16x128xf32>
    %c0_8 = arith.constant 0 : index
    %c0_9 = arith.constant 0 : index
    %25 = vector.load %arg3[%c0_8, %c0_9] : memref<1x128xf32, #tpu.memory_space<vmem>>, vector<1x128xf32>
    %26 = vector.broadcast %25 : vector<1x128xf32> to vector<16x128xf32>
    %27 = arith.addf %24, %26 : vector<16x128xf32>
    %28 = arith.truncf %27 : vector<16x128xf32> to vector<16x128xbf16>
    %c0_10 = arith.constant 0 : index
    %c0_11 = arith.constant 0 : index
    %29 = vector.load %arg4[%c0_10, %c0_11] : memref<128x256xbf16, #tpu.memory_space<vmem>>, vector<128x256xbf16>
    %cst_12 = arith.constant dense<0.000000e+00> : vector<16x256xf32>
    %30 = tpu.matmul %28, %29, %cst_12 {dimension_numbers = #tpu.dot_dimension_numbers<[1], [0], [0], [1], [0, 0, 1, 1], [], []>} : vector<16x128xbf16>, vector<128x256xbf16>, vector<16x256xf32> -> vector<16x256xf32>
    %c0_13 = arith.constant 0 : index
    %c0_14 = arith.constant 0 : index
    %31 = vector.load %arg5[%c0_13, %c0_14] : memref<1x256xf32, #tpu.memory_space<vmem>>, vector<1x256xf32>
    %32 = vector.broadcast %31 : vector<1x256xf32> to vector<16x256xf32>
    %33 = arith.addf %30, %32 : vector<16x256xf32>
    %34 = arith.truncf %33 : vector<16x256xf32> to vector<16x256xbf16>
    %c0_15 = arith.constant 0 : index
    %c0_16 = arith.constant 0 : index
    %35 = vector.load %arg6[%c0_15, %c0_16] : memref<16x256xbf16, #tpu.memory_space<vmem>>, vector<16x256xbf16>
    tpu.vector_store %arg6[%c0_15, %c0_16], %34 {strides = array<i32>} : memref<16x256xbf16, #tpu.memory_space<vmem>>, vector<16x256xbf16>,
    return
  }
  func.func @transform_0(%arg0: i32) -> (i32, i32) {
    %c0_i32 = arith.constant 0 : i32
    %c0_i32_0 = arith.constant 0 : i32
    return %arg0, %c0_i32 : i32, i32
  }
  func.func @transform_1(%arg0: i32) -> (i32, i32) {
    %c0_i32 = arith.constant 0 : i32
    %c0_i32_0 = arith.constant 0 : i32
    %c0_i32_1 = arith.constant 0 : i32
    return %c0_i32, %c0_i32_0 : i32, i32
  }
  func.func @transform_2(%arg0: i32) -> (i32, i32) {
    %c0_i32 = arith.constant 0 : i32
    %c0_i32_0 = arith.constant 0 : i32
    %c0_i32_1 = arith.constant 0 : i32
    return %c0_i32, %c0_i32_0 : i32, i32
  }
  func.func @transform_3(%arg0: i32) -> (i32, i32) {
    %c0_i32 = arith.constant 0 : i32
    %c0_i32_0 = arith.constant 0 : i32
    %c0_i32_1 = arith.constant 0 : i32
    return %c0_i32, %c0_i32_0 : i32, i32
  }
  func.func @transform_4(%arg0: i32) -> (i32, i32) {
    %c0_i32 = arith.constant 0 : i32
    %c0_i32_0 = arith.constant 0 : i32
    %c0_i32_1 = arith.constant 0 : i32
    return %c0_i32, %c0_i32_0 : i32, i32
  }
  func.func @transform_5(%arg0: i32) -> (i32, i32) {
    %c0_i32 = arith.constant 0 : i32
    %c0_i32_0 = arith.constant 0 : i32
    return %arg0, %c0_i32 : i32, i32
  }
}

</mosaic_0001>

<llo_original>
// kernel: tpu_custom_call.1
$region0: #{tpu_custom_call.1}
  #allocation0 [shape = 'u32[]', space=smem, size = 0x4, offset = 0x4, fixed_abs, tag = 'smem constant byte address 0x4 - core index']
  #allocation1 [shape = 'u32[144,128]{1,0:T(1,128)}', space=vmem, size = 0x12000, scoped, tag = 'internal scratch']
  %s0 = inlined_call_operand.hbm [shape: bf16[16,128], index: 0, kind: input, shape index: {}]
  %s1 = inlined_call_operand.vmem [shape: f32[1,128], index: 1, kind: input, shape index: {}]
  %s2 = inlined_call_operand.vmem [shape: f32[1,128], index: 2, kind: input, shape index: {}]
  %s3 = inlined_call_operand.hbm [shape: bf16[128,256], index: 3, kind: input, shape index: {}]
  %s4 = inlined_call_operand.vmem [shape: f32[1,256], index: 4, kind: input, shape index: {}]
  %s5 = inlined_call_operand.hbm [shape: bf16[16,256], index: 5, kind: output, shape index: {}]
  %s6 = sld [smem:[#allocation0]]
  $region38: #{tpu_custom_call.1} parent=0
    _
  %s8 = ssub.s32 1, %s6
  %s9 = scalar_select 0, %s8, %s6
  $region1: #{tpu_custom_call.1} parent=0
    #allocation2 [shape = 'u8[4096]{0}', space=vmem, size = 0x1000, scoped, tag = 'input window, operand 0, single buffered']
    #allocation3 [shape = 's32[1]{0}', space=sflag, size = 0x4, scoped, tag = 'scoped memory for tpu_custom_call.1']
    #allocation4 [shape = 's32[1]{0}', space=sflag, size = 0x4, scoped, tag = 'scoped memory for tpu_custom_call.1']
    #allocation5 [shape = 'u8[65536]{0}', space=vmem, size = 0x10000, scoped, tag = 'input window, operand 3, single buffered']
    #allocation6 [shape = 's32[1]{0}', space=sflag, size = 0x4, scoped, tag = 'scoped memory for tpu_custom_call.1']
    #allocation7 [shape = 'u8[8192]{0}', space=vmem, size = 0x2000, scoped, tag = 'output window, operand 0, single buffered']
    %10 = vsyncpa [#allocation3], 0
    %11 = vsyncpa [#allocation6], 0
    %12 = vsyncpa [#allocation4], 0
    // Predicated region
    $region2: #{tpu_custom_call.1} parent=1 // pred_check
      _
    $region3: #{tpu_custom_call.1} parent=1 // pred_check_branch
      %14 = sbr.rel (0) target = $region5
    $region4: #{tpu_custom_call.1} parent=1 // pred_region
      %s16 = ssub.s32 128, 128
      %17 = vsyncadd [#allocation3], %s16
      %s18 = sshll.u32 [#allocation2], 4
      %s19 = int_to_ptr.vmem [resolvable:$true] %s18
      %24 = dma.hbm_to_vmem [thread:$0]  %s0, 128, %s19, [#allocation3], 64, 64, 4
    $region5: #{tpu_custom_call.1} parent=1 // pred_fallthru
      _
    // Predicated region
    $region6: #{tpu_custom_call.1} parent=1 // pred_check
      _
    $region7: #{tpu_custom_call.1} parent=1 // pred_check_branch
      %26 = sbr.rel (0) target = $region9
    $region8: #{tpu_custom_call.1} parent=1 // pred_region
      _
    $region9: #{tpu_custom_call.1} parent=1 // pred_fallthru
      _
    // Predicated region
    $region10: #{tpu_custom_call.1} parent=1 // pred_check
      _
    $region11: #{tpu_custom_call.1} parent=1 // pred_check_branch
      %28 = sbr.rel (0) target = $region13
    $region12: #{tpu_custom_call.1} parent=1 // pred_region
      _
    $region13: #{tpu_custom_call.1} parent=1 // pred_fallthru
      _
    // Predicated region
    $region14: #{tpu_custom_call.1} parent=1 // pred_check
      _
    $region15: #{tpu_custom_call.1} parent=1 // pred_check_branch
      %30 = sbr.rel (0) target = $region17
    $region16: #{tpu_custom_call.1} parent=1 // pred_region
      %s32 = ssub.s32 2048, 2048
      %33 = vsyncadd [#allocation6], %s32
      %s34 = sshll.u32 [#allocation5], 4
      %s35 = int_to_ptr.vmem [resolvable:$true] %s34
      %40 = dma.hbm_to_vmem [thread:$0]  %s3, 2048, %s35, [#allocation6], 128, 128, 8
    $region17: #{tpu_custom_call.1} parent=1 // pred_fallthru
      _
    // Predicated region
    $region18: #{tpu_custom_call.1} parent=1 // pred_check
      _
    $region19: #{tpu_custom_call.1} parent=1 // pred_check_branch
      %42 = sbr.rel (0) target = $region21
    $region20: #{tpu_custom_call.1} parent=1 // pred_region
      _
    $region21: #{tpu_custom_call.1} parent=1 // pred_fallthru
      _
    // Predicated region
    $region22: #{tpu_custom_call.1} parent=1 // pred_check
      _
    $region23: #{tpu_custom_call.1} parent=1 // pred_check_branch
      %44 = sbr.rel (0) target = $region25
    $region24: #{tpu_custom_call.1} parent=1 // pred_region
      %45 = dma.done [#allocation3], 128
    $region25: #{tpu_custom_call.1} parent=1 // pred_fallthru
      _
    // Predicated region
    $region26: #{tpu_custom_call.1} parent=1 // pred_check
      _
    $region27: #{tpu_custom_call.1} parent=1 // pred_check_branch
      %47 = sbr.rel (0) target = $region29
    $region28: #{tpu_custom_call.1} parent=1 // pred_region
      %48 = dma.done [#allocation6], 2048
    $region29: #{tpu_custom_call.1} parent=1 // pred_fallthru
      _
    %v50 = vld [vmem:[#allocation2] sm:$0xf]
    %v51 = vld [vmem:[#allocation2 + $0x4] sm:$0xf]
    %v52 = vunpack.c.l.bf16 %v50
    %v53 = vunpack.c.l.bf16 %v51
    %54 = vadd.xlane.f32.xlu0 %v52
    %v55 = vpop.xlane.xlu0 %54
    %56 = vadd.xlane.f32.xlu0 %v53
    %v57 = vpop.xlane.xlu0 %56
    %v58 = vrcp.pop 128.0
    %v59 = vmul.f32 %v55, %v58
    %v60 = vmul.f32 %v57, %v58
    %v61 = vmul.f32 %v52, %v52
    %v62 = vmul.f32 %v53, %v53
    %63 = vadd.xlane.f32.xlu0 %v61
    %v64 = vpop.xlane.xlu0 %63
    %65 = vadd.xlane.f32.xlu0 %v62
    %v66 = vpop.xlane.xlu0 %65
    %v67 = vmul.f32 %v64, %v58
    %v68 = vmul.f32 %v66, %v58
    %v69 = vmul.f32 %v59, %v59
    %v70 = vmul.f32 %v60, %v60
    %v71 = vsub.f32 %v67, %v69
    %v72 = vsub.f32 %v68, %v70
    %v73 = vmax.f32 %v71, 0.0
    %v74 = vmax.f32 %v72, 0.0
    %v75 = vsub.f32 %v52, %v59
    %v76 = vsub.f32 %v53, %v60
    %v77 = vadd.f32 %v73, 1e-05
    %v78 = vadd.f32 %v74, 1e-05
    %v79 = vrsqrt.pop %v77
    %v80 = vrsqrt.pop %v78
    %v81 = vmul.f32 %v75, %v79
    %v82 = vmul.f32 %v76, %v80
    %v83 = vld [vmem:[%s1] sm:$0x1]
    %v85 = vlaneseq
    %v86 = vshrl.u32 %v85, 7
    %v87 = vsub.s32 0, %v86
    %v88 = vrot.slane %v83, %v87
    %v90 = vmul.f32 %v81, %v88
    %v91 = vmul.f32 %v82, %v88
    %v92 = vld [vmem:[%s2] sm:$0x1]
    %v94 = vlaneseq
    %v95 = vshrl.u32 %v94, 7
    %v96 = vsub.s32 0, %v95
    %v97 = vrot.slane %v92, %v96
    %v99 = vadd.f32 %v90, %v97
    %v100 = vadd.f32 %v91, %v97
    %v101 = vpack.c.bf16 %v100, %v99
    %v102 = vld [vmem:[#allocation5] sm:$0xff]
    %v103 = vld [vmem:[#allocation5 + $0x8] sm:$0xff]
    %v104 = vld [vmem:[#allocation5 + $0x10] sm:$0xff]
    %v105 = vld [vmem:[#allocation5 + $0x18] sm:$0xff]
    %v106 = vld [vmem:[#allocation5 + $0x20] sm:$0xff]
    %v107 = vld [vmem:[#allocation5 + $0x28] sm:$0xff]
    %v108 = vld [vmem:[#allocation5 + $0x30] sm:$0xff]
    %v109 = vld [vmem:[#allocation5 + $0x38] sm:$0xff]
    %v110 = vld [vmem:[#allocation5 + $0x40] sm:$0xff]
    %v111 = vld [vmem:[#allocation5 + $0x48] sm:$0xff]
    %v112 = vld [vmem:[#allocation5 + $0x50] sm:$0xff]
    %v113 = vld [vmem:[#allocation5 + $0x58] sm:$0xff]
    %v114 = vld [vmem:[#allocation5 + $0x60] sm:$0xff]
    %v115 = vld [vmem:[#allocation5 + $0x68] sm:$0xff]
    %v116 = vld [vmem:[#allocation5 + $0x70] sm:$0xff]
    %v117 = vld [vmem:[#allocation5 + $0x78] sm:$0xff]
    %v118 = vld [vmem:[%s4] sm:$0x3]
    %v120 = vlaneseq
    %v121 = vshrl.u32 %v120, 7
    %v122 = vsub.s32 0, %v121
    %v123 = vrot.slane %v118, %v122
    %v124 = vlaneseq
    %v125 = vshrl.u32 %v124, 7
    %v126 = vsub.s32 1, %v125
    %v127 = vrot.slane %v118, %v126
    %v146 = vunpack.c.l.b16 %v102
    %v147 = vunpack.c.h.b16 %v102
    %v148 = vunpack.c.l.b16 %v103
    %v149 = vunpack.c.h.b16 %v103
    %v150 = vunpack.c.l.b16 %v104
    %v151 = vunpack.c.h.b16 %v104
    %v152 = vunpack.c.l.b16 %v105
    %v153 = vunpack.c.h.b16 %v105
    %v154 = vunpack.c.l.b16 %v106
    %v155 = vunpack.c.h.b16 %v106
    %v156 = vunpack.c.l.b16 %v107
    %v157 = vunpack.c.h.b16 %v107
    %v158 = vunpack.c.l.b16 %v108
    %v159 = vunpack.c.h.b16 %v108
    %v160 = vunpack.c.l.b16 %v109
    %v161 = vunpack.c.h.b16 %v109
    %v162 = vunpack.c.l.b16 %v110
    %v163 = vunpack.c.h.b16 %v110
    %v164 = vunpack.c.l.b16 %v111
    %v165 = vunpack.c.h.b16 %v111
    %v166 = vunpack.c.l.b16 %v112
    %v167 = vunpack.c.h.b16 %v112
    %v168 = vunpack.c.l.b16 %v113
    %v169 = vunpack.c.h.b16 %v113
    %v170 = vunpack.c.l.b16 %v114
    %v171 = vunpack.c.h.b16 %v114
    %v172 = vunpack.c.l.b16 %v115
    %v173 = vunpack.c.h.b16 %v115
    %v174 = vunpack.c.l.b16 %v116
    %v175 = vunpack.c.h.b16 %v116
    %v176 = vunpack.c.l.b16 %v117
    %v177 = vunpack.c.h.b16 %v117
    %v178 = vpack.c.b16 %v148, %v146
    %v179 = vpack.c.b16 %v149, %v147
    %v180 = vpack.c.b16 %v152, %v150
    %v181 = vpack.c.b16 %v153, %v151
    %v182 = vpack.c.b16 %v156, %v154
    %v183 = vpack.c.b16 %v157, %v155
    %v184 = vpack.c.b16 %v160, %v158
    %v185 = vpack.c.b16 %v161, %v159
    %v186 = vpack.c.b16 %v164, %v162
    %v187 = vpack.c.b16 %v165, %v163
    %v188 = vpack.c.b16 %v168, %v166
    %v189 = vpack.c.b16 %v169, %v167
    %v190 = vpack.c.b16 %v172, %v170
    %v191 = vpack.c.b16 %v173, %v171
    %v192 = vpack.c.b16 %v176, %v174
    %v193 = vpack.c.b16 %v177, %v175
    %210 = vmatprep.subr.bf16.mxu0 %v179
    %211 = vmatpush1.bf16.msra.mxu0 %v178
    %212 = vmatprep.subr.bf16.mxu0 %v181
    %213 = vmatpush1.bf16.msra.mxu0 %v180
    %214 = vmatprep.subr.bf16.mxu0 %v183
    %215 = vmatpush1.bf16.msra.mxu0 %v182
    %216 = vmatprep.subr.bf16.mxu0 %v185
    %217 = vmatpush1.bf16.msra.mxu0 %v184
    %218 = vmatprep.subr.bf16.mxu0 %v187
    %219 = vmatpush1.bf16.msra.mxu0 %v186
    %220 = vmatprep.subr.bf16.mxu0 %v189
    %221 = vmatpush1.bf16.msra.mxu0 %v188
    %222 = vmatprep.subr.bf16.mxu0 %v191
    %223 = vmatpush1.bf16.msra.mxu0 %v190
    %224 = vmatprep.subr.bf16.mxu0 %v193
    %225 = vmatpush1.bf16.msra.mxu0 %v192
    %226 = vmatprep.subr.bf16.mxu0 0
    %227 = vmatpush1.bf16.msra.mxu0 0
    %228 = vmatprep.subr.bf16.mxu0 0
    %229 = vmatpush1.bf16.msra.mxu0 0
    %230 = vmatprep.subr.bf16.mxu0 0
    %231 = vmatpush1.bf16.msra.mxu0 0
    %232 = vmatprep.subr.bf16.mxu0 0
    %233 = vmatpush1.bf16.msra.mxu0 0
    %234 = vmatprep.subr.bf16.mxu0 0
    %235 = vmatpush1.bf16.msra.mxu0 0
    %236 = vmatprep.subr.bf16.mxu0 0
    %237 = vmatpush1.bf16.msra.mxu0 0
    %238 = vmatprep.subr.bf16.mxu0 0
    %239 = vmatpush1.bf16.msra.mxu0 0
    %240 = vmatprep.subr.bf16.mxu0 0
    %241 = vmatpush1.bf16.msra.mxu0 0
    %242 = vmatprep.mubr.bf16.mxu0 0
    %243 = vmatmul.mubr.bf16.gmra.mrb[0].mxu0 %v101
    %v244 = vpop.f32.mrb[0].mxu0
    %v245 = vadd.f32 %v123, %v244
    %v246 = vpop.f32.mrb[0].mxu0
    %v247 = vadd.f32 %v127, %v246
    %v248 = vpop.f32.mrb[0].mxu0
    %v249 = vadd.f32 %v123, %v248
    %v250 = vpop.f32.mrb[0].mxu0
    %v251 = vadd.f32 %v127, %v250
    %252 = vdwg.mxu0
    %v253 = vpack.c.bf16 %v249, %v245
    %v254 = vpack.c.bf16 %v251, %v247
    %v257 = vunpack.c.l.b16 %v253
    %v258 = vunpack.c.l.b16 %v254
    %v259 = vunpack.c.h.b16 %v253
    %v260 = vunpack.c.h.b16 %v254
    %v261 = vpack.c.b16 %v258, %v257
    %v262 = vpack.c.b16 %v260, %v259
    %265 = vst [vmem:[#allocation7] sm:$0xff] %v261
    %266 = vst [vmem:[#allocation7 + $0x8] sm:$0xff] %v262
    // Predicated region
    $region30: #{tpu_custom_call.1} parent=1 // pred_check
      _
    $region31: #{tpu_custom_call.1} parent=1 // pred_check_branch
      %268 = sbr.rel (0) target = $region33
    $region32: #{tpu_custom_call.1} parent=1 // pred_region
      %s270 = ssub.s32 256, 256
      %271 = vsyncadd [#allocation4], %s270
      %s272 = sshll.u32 [#allocation7], 4
      %s273 = int_to_ptr.vmem [resolvable:$true] %s272
      %278 = dma.vmem_to_hbm [thread:$0]  %s273, 256, %s5, [#allocation4], 128, 128, 8
    $region33: #{tpu_custom_call.1} parent=1 // pred_fallthru
      _
    // Predicated region
    $region34: #{tpu_custom_call.1} parent=1 // pred_check
      _
    $region35: #{tpu_custom_call.1} parent=1 // pred_check_branch
      %280 = sbr.rel (0) target = $region37
    $region36: #{tpu_custom_call.1} parent=1 // pred_region
      %281 = dma.done [#allocation4], 256
    $region37: #{tpu_custom_call.1} parent=1 // pred_fallthru
      _
    %282 = vsyncpa [#allocation3], 1
    %283 = vsyncpa [#allocation6], 1
    %284 = vsyncpa [#allocation4], 1

// kernel: tpu_custom_call.1
$region0: #{tpu_custom_call.1}
  #allocation0 [shape = 'u32[]', space=smem, size = 0x4, offset = 0x4, fixed_abs, tag = 'smem constant byte address 0x4 - core index']
  #allocation1 [shape = 'u32[144,128]{1,0:T(1,128)}', space=vmem, size = 0x12000, scoped, tag = 'internal scratch']
  %s0 = inlined_call_operand.hbm [shape: bf16[16,128], index: 0, kind: input, shape index: {}]
  %s1 = inlined_call_operand.vmem [shape: f32[1,128], index: 1, kind: input, shape index: {}]
  %s2 = inlined_call_operand.vmem [shape: f32[1,128], index: 2, kind: input, shape index: {}]
  %s3 = inlined_call_operand.hbm [shape: bf16[128,256], index: 3, kind: input, shape index: {}]
  %s4 = inlined_call_operand.vmem [shape: f32[1,256], index: 4, kind: input, shape index: {}]
  %s5 = inlined_call_operand.hbm [shape: bf16[16,256], index: 5, kind: output, shape index: {}]
  %s6 = sld [smem:[#allocation0]]
  $region38: #{tpu_custom_call.1} parent=0
    _
  %s8 = ssub.s32 1, %s6
  %s9 = scalar_select 0, %s8, %s6
  $region1: #{tpu_custom_call.1} parent=0
    #allocation2 [shape = 'u8[4096]{0}', space=vmem, size = 0x1000, scoped, tag = 'input window, operand 0, single buffered']
    #allocation3 [shape = 's32[1]{0}', space=sflag, size = 0x4, scoped, tag = 'scoped memory for tpu_custom_call.1']
    #allocation4 [shape = 's32[1]{0}', space=sflag, size = 0x4, scoped, tag = 'scoped memory for tpu_custom_call.1']
    #allocation5 [shape = 'u8[65536]{0}', space=vmem, size = 0x10000, scoped, tag = 'input window, operand 3, single buffered']
    #allocation6 [shape = 's32[1]{0}', space=sflag, size = 0x4, scoped, tag = 'scoped memory for tpu_custom_call.1']
    #allocation7 [shape = 'u8[8192]{0}', space=vmem, size = 0x2000, scoped, tag = 'output window, operand 0, single buffered']
    %10 = vsyncpa [#allocation3], 0
    %11 = vsyncpa [#allocation6], 0
    %12 = vsyncpa [#allocation4], 0
    // Predicated region
    $region2: #{tpu_custom_call.1} parent=1 // pred_check
      _
    $region3: #{tpu_custom_call.1} parent=1 // pred_check_branch
      %14 = sbr.rel (0) target = $region5
    $region4: #{tpu_custom_call.1} parent=1 // pred_region
      %s16 = ssub.s32 128, 128
      %17 = vsyncadd [#allocation3], %s16
      %s18 = sshll.u32 [#allocation2], 4
      %s19 = int_to_ptr.vmem [resolvable:$true] %s18
      %24 = dma.hbm_to_vmem [thread:$0]  %s0, 128, %s19, [#allocation3], 64, 64, 4
    $region5: #{tpu_custom_call.1} parent=1 // pred_fallthru
      _
    // Predicated region
    $region6: #{tpu_custom_call.1} parent=1 // pred_check
      _
    $region7: #{tpu_custom_call.1} parent=1 // pred_check_branch
      %26 = sbr.rel (0) target = $region9
    $region8: #{tpu_custom_call.1} parent=1 // pred_region
      _
    $region9: #{tpu_custom_call.1} parent=1 // pred_fallthru
      _
    // Predicated region
    $region10: #{tpu_custom_call.1} parent=1 // pred_check
      _
    $region11: #{tpu_custom_call.1} parent=1 // pred_check_branch
      %28 = sbr.rel (0) target = $region13
    $region12: #{tpu_custom_call.1} parent=1 // pred_region
      _
    $region13: #{tpu_custom_call.1} parent=1 // pred_fallthru
      _
    // Predicated region
    $region14: #{tpu_custom_call.1} parent=1 // pred_check
      _
    $region15: #{tpu_custom_call.1} parent=1 // pred_check_branch
      %30 = sbr.rel (0) target = $region17
    $region16: #{tpu_custom_call.1} parent=1 // pred_region
      %s32 = ssub.s32 2048, 2048
      %33 = vsyncadd [#allocation6], %s32
      %s34 = sshll.u32 [#allocation5], 4
      %s35 = int_to_ptr.vmem [resolvable:$true] %s34
      %40 = dma.hbm_to_vmem [thread:$0]  %s3, 2048, %s35, [#allocation6], 128, 128, 8
    $region17: #{tpu_custom_call.1} parent=1 // pred_fallthru
      _
    // Predicated region
    $region18: #{tpu_custom_call.1} parent=1 // pred_check
      _
    $region19: #{tpu_custom_call.1} parent=1 // pred_check_branch
      %42 = sbr.rel (0) target = $region21
    $region20: #{tpu_custom_call.1} parent=1 // pred_region
      _
    $region21: #{tpu_custom_call.1} parent=1 // pred_fallthru
      _
    // Predicated region
    $region22: #{tpu_custom_call.1} parent=1 // pred_check
      _
    $region23: #{tpu_custom_call.1} parent=1 // pred_check_branch
      %44 = sbr.rel (0) target = $region25
    $region24: #{tpu_custom_call.1} parent=1 // pred_region
      %45 = dma.done [#allocation3], 128
    $region25: #{tpu_custom_call.1} parent=1 // pred_fallthru
      _
    // Predicated region
    $region26: #{tpu_custom_call.1} parent=1 // pred_check
      _
    $region27: #{tpu_custom_call.1} parent=1 // pred_check_branch
      %47 = sbr.rel (0) target = $region29
    $region28: #{tpu_custom_call.1} parent=1 // pred_region
      %48 = dma.done [#allocation6], 2048
    $region29: #{tpu_custom_call.1} parent=1 // pred_fallthru
      _
    %v50 = vld [vmem:[#allocation2] sm:$0xf]
    %v51 = vld [vmem:[#allocation2 + $0x4] sm:$0xf]
    %v52 = vunpack.c.l.bf16 %v50
    %v53 = vunpack.c.l.bf16 %v51
    %54 = vadd.xlane.f32.xlu0 %v52
    %v55 = vpop.xlane.xlu0 %54
    %56 = vadd.xlane.f32.xlu0 %v53
    %v57 = vpop.xlane.xlu0 %56
    %v58 = vrcp.pop 128.0
    %v59 = vmul.f32 %v55, %v58
    %v60 = vmul.f32 %v57, %v58
    %v61 = vmul.f32 %v52, %v52
    %v62 = vmul.f32 %v53, %v53
    %63 = vadd.xlane.f32.xlu0 %v61
    %v64 = vpop.xlane.xlu0 %63
    %65 = vadd.xlane.f32.xlu0 %v62
    %v66 = vpop.xlane.xlu0 %65
    %v67 = vmul.f32 %v64, %v58
    %v68 = vmul.f32 %v66, %v58
    %v69 = vmul.f32 %v59, %v59
    %v70 = vmul.f32 %v60, %v60
    %v71 = vsub.f32 %v67, %v69
    %v72 = vsub.f32 %v68, %v70
    %v73 = vmax.f32 %v71, 0.0
    %v74 = vmax.f32 %v72, 0.0
    %v75 = vsub.f32 %v52, %v59
    %v76 = vsub.f32 %v53, %v60
    %v77 = vadd.f32 %v73, 1e-05
    %v78 = vadd.f32 %v74, 1e-05
    %v79 = vrsqrt.pop %v77
    %v80 = vrsqrt.pop %v78
    %v81 = vmul.f32 %v75, %v79
    %v82 = vmul.f32 %v76, %v80
    %v83 = vld [vmem:[%s1] sm:$0x1]
    %v85 = vlaneseq
    %v86 = vshrl.u32 %v85, 7
    %v87 = vsub.s32 0, %v86
    %v88 = vrot.slane %v83, %v87
    %v90 = vmul.f32 %v81, %v88
    %v91 = vmul.f32 %v82, %v88
    %v92 = vld [vmem:[%s2] sm:$0x1]
    %v94 = vlaneseq
    %v95 = vshrl.u32 %v94, 7
    %v96 = vsub.s32 0, %v95
    %v97 = vrot.slane %v92, %v96
    %v99 = vadd.f32 %v90, %v97
    %v100 = vadd.f32 %v91, %v97
    %v101 = vpack.c.bf16 %v100, %v99
    %v102 = vld [vmem:[#allocation5] sm:$0xff]
    %v103 = vld [vmem:[#allocation5 + $0x8] sm:$0xff]
    %v104 = vld [vmem:[#allocation5 + $0x10] sm:$0xff]
    %v105 = vld [vmem:[#allocation5 + $0x18] sm:$0xff]
    %v106 = vld [vmem:[#allocation5 + $0x20] sm:$0xff]
    %v107 = vld [vmem:[#allocation5 + $0x28] sm:$0xff]
    %v108 = vld [vmem:[#allocation5 + $0x30] sm:$0xff]
    %v109 = vld [vmem:[#allocation5 + $0x38] sm:$0xff]
    %v110 = vld [vmem:[#allocation5 + $0x40] sm:$0xff]
    %v111 = vld [vmem:[#allocation5 + $0x48] sm:$0xff]
    %v112 = vld [vmem:[#allocation5 + $0x50] sm:$0xff]
    %v113 = vld [vmem:[#allocation5 + $0x58] sm:$0xff]
    %v114 = vld [vmem:[#allocation5 + $0x60] sm:$0xff]
    %v115 = vld [vmem:[#allocation5 + $0x68] sm:$0xff]
    %v116 = vld [vmem:[#allocation5 + $0x70] sm:$0xff]
    %v117 = vld [vmem:[#allocation5 + $0x78] sm:$0xff]
    %v118 = vld [vmem:[%s4] sm:$0x3]
    %v120 = vlaneseq
    %v121 = vshrl.u32 %v120, 7
    %v122 = vsub.s32 0, %v121
    %v123 = vrot.slane %v118, %v122
    %v124 = vlaneseq
    %v125 = vshrl.u32 %v124, 7
    %v126 = vsub.s32 1, %v125
    %v127 = vrot.slane %v118, %v126
    %v146 = vunpack.c.l.b16 %v102
    %v147 = vunpack.c.h.b16 %v102
    %v148 = vunpack.c.l.b16 %v103
    %v149 = vunpack.c.h.b16 %v103
    %v150 = vunpack.c.l.b16 %v104
    %v151 = vunpack.c.h.b16 %v104
    %v152 = vunpack.c.l.b16 %v105
    %v153 = vunpack.c.h.b16 %v105
    %v154 = vunpack.c.l.b16 %v106
    %v155 = vunpack.c.h.b16 %v106
    %v156 = vunpack.c.l.b16 %v107
    %v157 = vunpack.c.h.b16 %v107
    %v158 = vunpack.c.l.b16 %v108
    %v159 = vunpack.c.h.b16 %v108
    %v160 = vunpack.c.l.b16 %v109
    %v161 = vunpack.c.h.b16 %v109
    %v162 = vunpack.c.l.b16 %v110
    %v163 = vunpack.c.h.b16 %v110
    %v164 = vunpack.c.l.b16 %v111
    %v165 = vunpack.c.h.b16 %v111
    %v166 = vunpack.c.l.b16 %v112
    %v167 = vunpack.c.h.b16 %v112
    %v168 = vunpack.c.l.b16 %v113
    %v169 = vunpack.c.h.b16 %v113
    %v170 = vunpack.c.l.b16 %v114
    %v171 = vunpack.c.h.b16 %v114
    %v172 = vunpack.c.l.b16 %v115
    %v173 = vunpack.c.h.b16 %v115
    %v174 = vunpack.c.l.b16 %v116
    %v175 = vunpack.c.h.b16 %v116
    %v176 = vunpack.c.l.b16 %v117
    %v177 = vunpack.c.h.b16 %v117
    %v178 = vpack.c.b16 %v148, %v146
    %v179 = vpack.c.b16 %v149, %v147
    %v180 = vpack.c.b16 %v152, %v150
    %v181 = vpack.c.b16 %v153, %v151
    %v182 = vpack.c.b16 %v156, %v154
    %v183 = vpack.c.b16 %v157, %v155
    %v184 = vpack.c.b16 %v160, %v158
    %v185 = vpack.c.b16 %v161, %v159
    %v186 = vpack.c.b16 %v164, %v162
    %v187 = vpack.c.b16 %v165, %v163
    %v188 = vpack.c.b16 %v168, %v166
    %v189 = vpack.c.b16 %v169, %v167
    %v190 = vpack.c.b16 %v172, %v170
    %v191 = vpack.c.b16 %v173, %v171
    %v192 = vpack.c.b16 %v176, %v174
    %v193 = vpack.c.b16 %v177, %v175
    %210 = vmatprep.subr.bf16.mxu0 %v179
    %211 = vmatpush1.bf16.msra.mxu0 %v178
    %212 = vmatprep.subr.bf16.mxu0 %v181
    %213 = vmatpush1.bf16.msra.mxu0 %v180
    %214 = vmatprep.subr.bf16.mxu0 %v183
    %215 = vmatpush1.bf16.msra.mxu0 %v182
    %216 = vmatprep.subr.bf16.mxu0 %v185
    %217 = vmatpush1.bf16.msra.mxu0 %v184
    %218 = vmatprep.subr.bf16.mxu0 %v187
    %219 = vmatpush1.bf16.msra.mxu0 %v186
    %220 = vmatprep.subr.bf16.mxu0 %v189
    %221 = vmatpush1.bf16.msra.mxu0 %v188
    %222 = vmatprep.subr.bf16.mxu0 %v191
    %223 = vmatpush1.bf16.msra.mxu0 %v190
    %224 = vmatprep.subr.bf16.mxu0 %v193
    %225 = vmatpush1.bf16.msra.mxu0 %v192
    %226 = vmatprep.subr.bf16.mxu0 0
    %227 = vmatpush1.bf16.msra.mxu0 0
    %228 = vmatprep.subr.bf16.mxu0 0
    %229 = vmatpush1.bf16.msra.mxu0 0
    %230 = vmatprep.subr.bf16.mxu0 0
    %231 = vmatpush1.bf16.msra.mxu0 0
    %232 = vmatprep.subr.bf16.mxu0 0
    %233 = vmatpush1.bf16.msra.mxu0 0
    %234 = vmatprep.subr.bf16.mxu0 0
    %235 = vmatpush1.bf16.msra.mxu0 0
    %236 = vmatprep.subr.bf16.mxu0 0
    %237 = vmatpush1.bf16.msra.mxu0 0
    %238 = vmatprep.subr.bf16.mxu0 0
    %239 = vmatpush1.bf16.msra.mxu0 0
    %240 = vmatprep.subr.bf16.mxu0 0
    %241 = vmatpush1.bf16.msra.mxu0 0
    %242 = vmatprep.mubr.bf16.mxu0 0
    %243 = vmatmul.mubr.bf16.gmra.mrb[0].mxu0 %v101
    %v244 = vpop.f32.mrb[0].mxu0
    %v245 = vadd.f32 %v123, %v244
    %v246 = vpop.f32.mrb[0].mxu0
    %v247 = vadd.f32 %v127, %v246
    %v248 = vpop.f32.mrb[0].mxu0
    %v249 = vadd.f32 %v123, %v248
    %v250 = vpop.f32.mrb[0].mxu0
    %v251 = vadd.f32 %v127, %v250
    %252 = vdwg.mxu0
    %v253 = vpack.c.bf16 %v249, %v245
    %v254 = vpack.c.bf16 %v251, %v247
    %v257 = vunpack.c.l.b16 %v253
    %v258 = vunpack.c.l.b16 %v254
    %v259 = vunpack.c.h.b16 %v253
    %v260 = vunpack.c.h.b16 %v254
    %v261 = vpack.c.b16 %v258, %v257
    %v262 = vpack.c.b16 %v260, %v259
    %265 = vst [vmem:[#allocation7] sm:$0xff] %v261
    %266 = vst [vmem:[#allocation7 + $0x8] sm:$0xff] %v262
    // Predicated region
    $region30: #{tpu_custom_call.1} parent=1 // pred_check
      _
    $region31: #{tpu_custom_call.1} parent=1 // pred_check_branch
      %268 = sbr.rel (0) target = $region33
    $region32: #{tpu_custom_call.1} parent=1 // pred_region
      %s270 = ssub.s32 256, 256
      %271 = vsyncadd [#allocation4], %s270
      %s272 = sshll.u32 [#allocation7], 4
      %s273 = int_to_ptr.vmem [resolvable:$true] %s272
      %278 = dma.vmem_to_hbm [thread:$0]  %s273, 256, %s5, [#allocation4], 128, 128, 8
    $region33: #{tpu_custom_call.1} parent=1 // pred_fallthru
      _
    // Predicated region
    $region34: #{tpu_custom_call.1} parent=1 // pred_check
      _
    $region35: #{tpu_custom_call.1} parent=1 // pred_check_branch
      %280 = sbr.rel (0) target = $region37
    $region36: #{tpu_custom_call.1} parent=1 // pred_region
      %281 = dma.done [#allocation4], 256
    $region37: #{tpu_custom_call.1} parent=1 // pred_fallthru
      _
    %282 = vsyncpa [#allocation3], 1
    %283 = vsyncpa [#allocation6], 1
    %284 = vsyncpa [#allocation4], 1

</llo_original>
